<compile_context>
chip_gen: v7x
topology: tpu7x:2x2x1
jax: 0.10.0
libtpu: 0.0.40
codegen_flags: <defaults>
</compile_context>

<pallas_src>
import jax
import jax.numpy as jnp
from jax.experimental import pallas as pl
from jax.experimental.pallas import tpu as pltpu


def _identity_alias_kernel(x_ref, o_ref):
    # Output buffer is aliased to the input buffer, so the data is already in
    # place.  touch() only establishes a fake read+write dependency so the
    # aliased output materializes — no DMA, no compute.
    pltpu.touch(o_ref)


def _identity_copy_kernel(x_ref, o_ref):
    # Pure copy — no `* 1.0` multiply (saves a VPU vmul per vreg and avoids
    # any -0.0 / NaN question a real multiply would raise).
    o_ref[...] = x_ref[...]


def _dropout_p0_zero_copy(x: jax.Array) -> jax.Array:
    """Identity via buffer aliasing: no HBM traffic, no grid, no compute."""
    return pl.pallas_call(
        _identity_alias_kernel,
        out_shape=jax.ShapeDtypeStruct(x.shape, x.dtype),
        in_specs=[pl.BlockSpec(memory_space=pl.ANY)],
        out_specs=pl.BlockSpec(memory_space=pl.ANY),
        input_output_aliases={0: 0},
    )(x)


def _dropout_p0_copy(x: jax.Array) -> jax.Array:
    """Identity as a single grid-less VMEM copy (safe fallback path)."""
    orig_shape = x.shape
    total = x.size
    # Prefer a sublane/lane aligned (8, 128*k) slab for dense, unmasked vst.
    if total % 8 == 0 and (total // 8) % 128 == 0:
        rows, cols = 8, total // 8
    else:
        cols = orig_shape[-1]
        rows = max(1, total // cols)
    x2d = x.reshape(rows, cols)

    out2d = pl.pallas_call(
        _identity_copy_kernel,
        out_shape=jax.ShapeDtypeStruct((rows, cols), x.dtype),
        in_specs=[pl.BlockSpec(memory_space=pltpu.MemorySpace.VMEM)],
        out_specs=pl.BlockSpec(memory_space=pltpu.MemorySpace.VMEM),
        input_output_aliases={0: 0},
    )(x2d)
    return out2d.reshape(orig_shape)


def dropout_p0(x: jax.Array) -> jax.Array:
    """Forward of M: Dropout(p=0.0) == identity."""
    try:
        out = _dropout_p0_zero_copy(x)
        jax.block_until_ready(out)
        return out
    except Exception:
        # Fallback: plain full-array copy kernel (still grid-less, aligned,
        # multiply-free) if the zero-copy aliasing path cannot lower here.
        return _dropout_p0_copy(x)


if __name__ == "__main__":
    key = jax.random.PRNGKey(0)
    # Shape from the module's forward: x574 ~ [1, 7, 7, 4096] (~802 KB fp32).
    x574 = jax.random.normal(key, (1, 7, 7, 4096), dtype=jnp.float32)
    # Host snapshot for verification (robust to output/input buffer aliasing).
    x574_host = jax.device_get(x574)

    x575 = dropout_p0(x574)
    jax.block_until_ready(x575)

    # Dropout(p=0.0) is exactly the identity.
    assert x575.shape == tuple(x574_host.shape)
    assert x575.dtype == jnp.float32
    assert (jax.device_get(x575) == x574_host).all()

    print("KERNEL_OK")
</pallas_src>

<mosaic_0001>
module attributes {stable_mosaic.version = 11 : i64} {
  func.func @_identity_alias_kernel(%arg0: memref<1x7x7x4096xf32, #tpu.memory_space<any>>, %arg1: memref<1x7x7x4096xf32, #tpu.memory_space<any>>) attributes {dimension_semantics = [], scalar_prefetch = 0 : i64, scratch_operands = 0 : i64, tpu.core_type = #tpu.core_type<tc>} {
    return
  }
}

module attributes {stable_mosaic.version = 11 : i64} {
  func.func @_identity_copy_kernel(%arg0: memref<8x25088xf32, #tpu.memory_space<vmem>>, %arg1: memref<8x25088xf32, #tpu.memory_space<vmem>>) attributes {dimension_semantics = [], scalar_prefetch = 0 : i64, scratch_operands = 0 : i64, tpu.core_type = #tpu.core_type<tc>} {
    %c0 = arith.constant 0 : index
    %c0_0 = arith.constant 0 : index
    %0 = vector.load %arg0[%c0, %c0_0] : memref<8x25088xf32, #tpu.memory_space<vmem>>, vector<8x25088xf32>
    %c0_1 = arith.constant 0 : index
    %c0_2 = arith.constant 0 : index
    %1 = vector.load %arg1[%c0_1, %c0_2] : memref<8x25088xf32, #tpu.memory_space<vmem>>, vector<8x25088xf32>
    tpu.vector_store %arg1[%c0_1, %c0_2], %0 {strides = array<i32>} : memref<8x25088xf32, #tpu.memory_space<vmem>>, vector<8x25088xf32>,
    return
  }
}

</mosaic_0001>

<llo_original>
// kernel: tpu_custom_call.1
$region0: #{tpu_custom_call.1}
  #allocation0 [shape = 'u32[]', space=smem, size = 0x4, offset = 0x4, fixed_abs, tag = 'smem constant byte address 0x4 - core index']
  #allocation1 [shape = 'u32[144,128]{1,0:T(1,128)}', space=vmem, size = 0x12000, scoped, tag = 'internal scratch']
  %s0 = inlined_call_operand.vmem [shape: f32[1,7,7,4096], index: 0, kind: input, shape index: {}, may-alias: {0,1}]
  %s1 = inlined_call_operand.vmem [shape: f32[1,7,7,4096], index: 1, kind: output, shape index: {}, may-alias: {0,1}]
  %s2 = sld [smem:[#allocation0]]
  $region2: #{tpu_custom_call.1} parent=0
    _
  %s4 = ssub.s32 1, %s2
  %s5 = scalar_select 0, %s4, %s2

// kernel: tpu_custom_call.1
$region0: #{tpu_custom_call.1}
  #allocation0 [shape = 'u32[]', space=smem, size = 0x4, offset = 0x4, fixed_abs, tag = 'smem constant byte address 0x4 - core index']
  #allocation1 [shape = 'u32[144,128]{1,0:T(1,128)}', space=vmem, size = 0x12000, scoped, tag = 'internal scratch']
  %s0 = inlined_call_operand.hbm [shape: f32[8,25088], index: 0, kind: input, shape index: {}, may-alias: {0,1}]
  %s1 = inlined_call_operand.hbm [shape: f32[8,25088], index: 1, kind: output, shape index: {}, may-alias: {0,1}]
  %s2 = sld [smem:[#allocation0]]
  $region18: #{tpu_custom_call.1} parent=0
    _
  %s4 = ssub.s32 1, %s2
  %s5 = scalar_select 0, %s4, %s2
  $region1: #{tpu_custom_call.1} parent=0
    #allocation2 [shape = 'u8[802816]{0}', space=vmem, size = 0xc4000, scoped, tag = 'input window, operand 0, single buffered']
    #allocation3 [shape = 's32[1]{0}', space=sflag, size = 0x4, scoped, tag = 'scoped memory for tpu_custom_call.1']
    #allocation4 [shape = 's32[1]{0}', space=sflag, size = 0x4, scoped, tag = 'scoped memory for tpu_custom_call.1']
    #allocation5 [shape = 'u8[802816]{0}', space=vmem, size = 0xc4000, scoped, tag = 'output window, operand 0, single buffered']
    %6 = vsyncpa [#allocation3], 0
    %7 = vsyncpa [#allocation4], 0
    // Predicated region
    $region2: #{tpu_custom_call.1} parent=1 // pred_check
      _
    $region3: #{tpu_custom_call.1} parent=1 // pred_check_branch
      %9 = sbr.rel (0) target = $region5
    $region4: #{tpu_custom_call.1} parent=1 // pred_region
      %s11 = ssub.s32 25088, 25088
      %12 = vsyncadd [#allocation3], %s11
      %s14 = sshll.u32 [#allocation2], 4
      %s15 = int_to_ptr.vmem [resolvable:$true] %s14
      %17 = dma.hbm_to_vmem [thread:$0]  %s0, 25088, %s15, [#allocation3]
    $region5: #{tpu_custom_call.1} parent=1 // pred_fallthru
      _
    // Predicated region
    $region6: #{tpu_custom_call.1} parent=1 // pred_check
      _
    $region7: #{tpu_custom_call.1} parent=1 // pred_check_branch
      %19 = sbr.rel (0) target = $region9
    $region8: #{tpu_custom_call.1} parent=1 // pred_region
      %20 = dma.done [#allocation3], 25088
    $region9: #{tpu_custom_call.1} parent=1 // pred_fallthru
      _
    %v21 = vld [vmem:[#allocation2] sm:$0xff]
    %v22 = vld [vmem:[#allocation2 + $0x8] sm:$0xff]
    %v23 = vld [vmem:[#allocation2 + $0x10] sm:$0xff]
    %v24 = vld [vmem:[#allocation2 + $0x18] sm:$0xff]
    %v25 = vld [vmem:[#allocation2 + $0x20] sm:$0xff]
    %v26 = vld [vmem:[#allocation2 + $0x28] sm:$0xff]
    %v27 = vld [vmem:[#allocation2 + $0x30] sm:$0xff]
    %v28 = vld [vmem:[#allocation2 + $0x38] sm:$0xff]
    %v29 = vld [vmem:[#allocation2 + $0x40] sm:$0xff]
    %v30 = vld [vmem:[#allocation2 + $0x48] sm:$0xff]
    %v31 = vld [vmem:[#allocation2 + $0x50] sm:$0xff]
    %v32 = vld [vmem:[#allocation2 + $0x58] sm:$0xff]
    %v33 = vld [vmem:[#allocation2 + $0x60] sm:$0xff]
    %v34 = vld [vmem:[#allocation2 + $0x68] sm:$0xff]
    %v35 = vld [vmem:[#allocation2 + $0x70] sm:$0xff]
    %v36 = vld [vmem:[#allocation2 + $0x78] sm:$0xff]
    %v37 = vld [vmem:[#allocation2 + $0x80] sm:$0xff]
    %v38 = vld [vmem:[#allocation2 + $0x88] sm:$0xff]
    %v39 = vld [vmem:[#allocation2 + $0x90] sm:$0xff]
    %v40 = vld [vmem:[#allocation2 + $0x98] sm:$0xff]
    %v41 = vld [vmem:[#allocation2 + $0xa0] sm:$0xff]
    %v42 = vld [vmem:[#allocation2 + $0xa8] sm:$0xff]
    %v43 = vld [vmem:[#allocation2 + $0xb0] sm:$0xff]
    %v44 = vld [vmem:[#allocation2 + $0xb8] sm:$0xff]
    %v45 = vld [vmem:[#allocation2 + $0xc0] sm:$0xff]
    %v46 = vld [vmem:[#allocation2 + $0xc8] sm:$0xff]
    %v47 = vld [vmem:[#allocation2 + $0xd0] sm:$0xff]
    %v48 = vld [vmem:[#allocation2 + $0xd8] sm:$0xff]
    %v49 = vld [vmem:[#allocation2 + $0xe0] sm:$0xff]
    %v50 = vld [vmem:[#allocation2 + $0xe8] sm:$0xff]
    %v51 = vld [vmem:[#allocation2 + $0xf0] sm:$0xff]
    %v52 = vld [vmem:[#allocation2 + $0xf8] sm:$0xff]
    %v53 = vld [vmem:[#allocation2 + $0x100] sm:$0xff]
    %v54 = vld [vmem:[#allocation2 + $0x108] sm:$0xff]
    %v55 = vld [vmem:[#allocation2 + $0x110] sm:$0xff]
    %v56 = vld [vmem:[#allocation2 + $0x118] sm:$0xff]
    %v57 = vld [vmem:[#allocation2 + $0x120] sm:$0xff]
    %v58 = vld [vmem:[#allocation2 + $0x128] sm:$0xff]
    %v59 = vld [vmem:[#allocation2 + $0x130] sm:$0xff]
    %v60 = vld [vmem:[#allocation2 + $0x138] sm:$0xff]
    %v61 = vld [vmem:[#allocation2 + $0x140] sm:$0xff]
    %v62 = vld [vmem:[#allocation2 + $0x148] sm:$0xff]
    %v63 = vld [vmem:[#allocation2 + $0x150] sm:$0xff]
    %v64 = vld [vmem:[#allocation2 + $0x158] sm:$0xff]
    %v65 = vld [vmem:[#allocation2 + $0x160] sm:$0xff]
    %v66 = vld [vmem:[#allocation2 + $0x168] sm:$0xff]
    %v67 = vld [vmem:[#allocation2 + $0x170] sm:$0xff]
    %v68 = vld [vmem:[#allocation2 + $0x178] sm:$0xff]
    %v69 = vld [vmem:[#allocation2 + $0x180] sm:$0xff]
    %v70 = vld [vmem:[#allocation2 + $0x188] sm:$0xff]
    %v71 = vld [vmem:[#allocation2 + $0x190] sm:$0xff]
    %v72 = vld [vmem:[#allocation2 + $0x198] sm:$0xff]
    %v73 = vld [vmem:[#allocation2 + $0x1a0] sm:$0xff]
    %v74 = vld [vmem:[#allocation2 + $0x1a8] sm:$0xff]
    %v75 = vld [vmem:[#allocation2 + $0x1b0] sm:$0xff]
    %v76 = vld [vmem:[#allocation2 + $0x1b8] sm:$0xff]
    %v77 = vld [vmem:[#allocation2 + $0x1c0] sm:$0xff]
    %v78 = vld [vmem:[#allocation2 + $0x1c8] sm:$0xff]
    %v79 = vld [vmem:[#allocation2 + $0x1d0] sm:$0xff]
    %v80 = vld [vmem:[#allocation2 + $0x1d8] sm:$0xff]
    %v81 = vld [vmem:[#allocation2 + $0x1e0] sm:$0xff]
    %v82 = vld [vmem:[#allocation2 + $0x1e8] sm:$0xff]
    %v83 = vld [vmem:[#allocation2 + $0x1f0] sm:$0xff]
    %v84 = vld [vmem:[#allocation2 + $0x1f8] sm:$0xff]
    %v85 = vld [vmem:[#allocation2 + $0x200] sm:$0xff]
    %v86 = vld [vmem:[#allocation2 + $0x208] sm:$0xff]
    %v87 = vld [vmem:[#allocation2 + $0x210] sm:$0xff]
    %v88 = vld [vmem:[#allocation2 + $0x218] sm:$0xff]
    %v89 = vld [vmem:[#allocation2 + $0x220] sm:$0xff]
    %v90 = vld [vmem:[#allocation2 + $0x228] sm:$0xff]
    %v91 = vld [vmem:[#allocation2 + $0x230] sm:$0xff]
    %v92 = vld [vmem:[#allocation2 + $0x238] sm:$0xff]
    %v93 = vld [vmem:[#allocation2 + $0x240] sm:$0xff]
    %v94 = vld [vmem:[#allocation2 + $0x248] sm:$0xff]
    %v95 = vld [vmem:[#allocation2 + $0x250] sm:$0xff]
    %v96 = vld [vmem:[#allocation2 + $0x258] sm:$0xff]
    %v97 = vld [vmem:[#allocation2 + $0x260] sm:$0xff]
    %v98 = vld [vmem:[#allocation2 + $0x268] sm:$0xff]
    %v99 = vld [vmem:[#allocation2 + $0x270] sm:$0xff]
    %v100 = vld [vmem:[#allocation2 + $0x278] sm:$0xff]
    %v101 = vld [vmem:[#allocation2 + $0x280] sm:$0xff]
    %v102 = vld [vmem:[#allocation2 + $0x288] sm:$0xff]
    %v103 = vld [vmem:[#allocation2 + $0x290] sm:$0xff]
    %v104 = vld [vmem:[#allocation2 + $0x298] sm:$0xff]
    %v105 = vld [vmem:[#allocation2 + $0x2a0] sm:$0xff]
    %v106 = vld [vmem:[#allocation2 + $0x2a8] sm:$0xff]
    %v107 = vld [vmem:[#allocation2 + $0x2b0] sm:$0xff]
    %v108 = vld [vmem:[#allocation2 + $0x2b8] sm:$0xff]
    %v109 = vld [vmem:[#allocation2 + $0x2c0] sm:$0xff]
    %v110 = vld [vmem:[#allocation2 + $0x2c8] sm:$0xff]
    %v111 = vld [vmem:[#allocation2 + $0x2d0] sm:$0xff]
    %v112 = vld [vmem:[#allocation2 + $0x2d8] sm:$0xff]
    %v113 = vld [vmem:[#allocation2 + $0x2e0] sm:$0xff]
    %v114 = vld [vmem:[#allocation2 + $0x2e8] sm:$0xff]
    %v115 = vld [vmem:[#allocation2 + $0x2f0] sm:$0xff]
    %v116 = vld [vmem:[#allocation2 + $0x2f8] sm:$0xff]
    %v117 = vld [vmem:[#allocation2 + $0x300] sm:$0xff]
    %v118 = vld [vmem:[#allocation2 + $0x308] sm:$0xff]
    %v119 = vld [vmem:[#allocation2 + $0x310] sm:$0xff]
    %v120 = vld [vmem:[#allocation2 + $0x318] sm:$0xff]
    %v121 = vld [vmem:[#allocation2 + $0x320] sm:$0xff]
    %v122 = vld [vmem:[#allocation2 + $0x328] sm:$0xff]
    %v123 = vld [vmem:[#allocation2 + $0x330] sm:$0xff]
    %v124 = vld [vmem:[#allocation2 + $0x338] sm:$0xff]
    %v125 = vld [vmem:[#allocation2 + $0x340] sm:$0xff]
    %v126 = vld [vmem:[#allocation2 + $0x348] sm:$0xff]
    %v127 = vld [vmem:[#allocation2 + $0x350] sm:$0xff]
    %v128 = vld [vmem:[#allocation2 + $0x358] sm:$0xff]
    %v129 = vld [vmem:[#allocation2 + $0x360] sm:$0xff]
    %v130 = vld [vmem:[#allocation2 + $0x368] sm:$0xff]
    %v131 = vld [vmem:[#allocation2 + $0x370] sm:$0xff]
    %v132 = vld [vmem:[#allocation2 + $0x378] sm:$0xff]
    %v133 = vld [vmem:[#allocation2 + $0x380] sm:$0xff]
    %v134 = vld [vmem:[#allocation2 + $0x388] sm:$0xff]
    %v135 = vld [vmem:[#allocation2 + $0x390] sm:$0xff]
    %v136 = vld [vmem:[#allocation2 + $0x398] sm:$0xff]
    %v137 = vld [vmem:[#allocation2 + $0x3a0] sm:$0xff]
    %v138 = vld [vmem:[#allocation2 + $0x3a8] sm:$0xff]
    %v139 = vld [vmem:[#allocation2 + $0x3b0] sm:$0xff]
    %v140 = vld [vmem:[#allocation2 + $0x3b8] sm:$0xff]
    %v141 = vld [vmem:[#allocation2 + $0x3c0] sm:$0xff]
    %v142 = vld [vmem:[#allocation2 + $0x3c8] sm:$0xff]
    %v143 = vld [vmem:[#allocation2 + $0x3d0] sm:$0xff]
    %v144 = vld [vmem:[#allocation2 + $0x3d8] sm:$0xff]
    %v145 = vld [vmem:[#allocation2 + $0x3e0] sm:$0xff]
    %v146 = vld [vmem:[#allocation2 + $0x3e8] sm:$0xff]
    %v147 = vld [vmem:[#allocation2 + $0x3f0] sm:$0xff]
    %v148 = vld [vmem:[#allocation2 + $0x3f8] sm:$0xff]
    %v149 = vld [vmem:[#allocation2 + $0x400] sm:$0xff]
    %v150 = vld [vmem:[#allocation2 + $0x408] sm:$0xff]
    %v151 = vld [vmem:[#allocation2 + $0x410] sm:$0xff]
    %v152 = vld [vmem:[#allocation2 + $0x418] sm:$0xff]
    %v153 = vld [vmem:[#allocation2 + $0x420] sm:$0xff]
    %v154 = vld [vmem:[#allocation2 + $0x428] sm:$0xff]
    %v155 = vld [vmem:[#allocation2 + $0x430] sm:$0xff]
    %v156 = vld [vmem:[#allocation2 + $0x438] sm:$0xff]
    %v157 = vld [vmem:[#allocation2 + $0x440] sm:$0xff]
    %v158 = vld [vmem:[#allocation2 + $0x448] sm:$0xff]
    %v159 = vld [vmem:[#allocation2 + $0x450] sm:$0xff]
    %v160 = vld [vmem:[#allocation2 + $0x458] sm:$0xff]
    %v161 = vld [vmem:[#allocation2 + $0x460] sm:$0xff]
    %v162 = vld [vmem:[#allocation2 + $0x468] sm:$0xff]
    %v163 = vld [vmem:[#allocation2 + $0x470] sm:$0xff]
    %v164 = vld [vmem:[#allocation2 + $0x478] sm:$0xff]
    %v165 = vld [vmem:[#allocation2 + $0x480] sm:$0xff]
    %v166 = vld [vmem:[#allocation2 + $0x488] sm:$0xff]
    %v167 = vld [vmem:[#allocation2 + $0x490] sm:$0xff]
    %v168 = vld [vmem:[#allocation2 + $0x498] sm:$0xff]
    %v169 = vld [vmem:[#allocation2 + $0x4a0] sm:$0xff]
    %v170 = vld [vmem:[#allocation2 + $0x4a8] sm:$0xff]
    %v171 = vld [vmem:[#allocation2 + $0x4b0] sm:$0xff]
    %v172 = vld [vmem:[#allocation2 + $0x4b8] sm:$0xff]
    %v173 = vld [vmem:[#allocation2 + $0x4c0] sm:$0xff]
    %v174 = vld [vmem:[#allocation2 + $0x4c8] sm:$0xff]
    %v175 = vld [vmem:[#allocation2 + $0x4d0] sm:$0xff]
    %v176 = vld [vmem:[#allocation2 + $0x4d8] sm:$0xff]
    %v177 = vld [vmem:[#allocation2 + $0x4e0] sm:$0xff]
    %v178 = vld [vmem:[#allocation2 + $0x4e8] sm:$0xff]
    %v179 = vld [vmem:[#allocation2 + $0x4f0] sm:$0xff]
    %v180 = vld [vmem:[#allocation2 + $0x4f8] sm:$0xff]
    %v181 = vld [vmem:[#allocation2 + $0x500] sm:$0xff]
    %v182 = vld [vmem:[#allocation2 + $0x508] sm:$0xff]
    %v183 = vld [vmem:[#allocation2 + $0x510] sm:$0xff]
    %v184 = vld [vmem:[#allocation2 + $0x518] sm:$0xff]
    %v185 = vld [vmem:[#allocation2 + $0x520] sm:$0xff]
    %v186 = vld [vmem:[#allocation2 + $0x528] sm:$0xff]
    %v187 = vld [vmem:[#allocation2 + $0x530] sm:$0xff]
    %v188 = vld [vmem:[#allocation2 + $0x538] sm:$0xff]
    %v189 = vld [vmem:[#allocation2 + $0x540] sm:$0xff]
    %v190 = vld [vmem:[#allocation2 + $0x548] sm:$0xff]
    %v191 = vld [vmem:[#allocation2 + $0x550] sm:$0xff]
    %v192 = vld [vmem:[#allocation2 + $0x558] sm:$0xff]
    %v193 = vld [vmem:[#allocation2 + $0x560] sm:$0xff]
    %v194 = vld [vmem:[#allocation2 + $0x568] sm:$0xff]
    %v195 = vld [vmem:[#allocation2 + $0x570] sm:$0xff]
    %v196 = vld [vmem:[#allocation2 + $0x578] sm:$0xff]
    %v197 = vld [vmem:[#allocation2 + $0x580] sm:$0xff]
    %v198 = vld [vmem:[#allocation2 + $0x588] sm:$0xff]
    %v199 = vld [vmem:[#allocation2 + $0x590] sm:$0xff]
    %v200 = vld [vmem:[#allocation2 + $0x598] sm:$0xff]
    %v201 = vld [vmem:[#allocation2 + $0x5a0] sm:$0xff]
    %v202 = vld [vmem:[#allocation2 + $0x5a8] sm:$0xff]
    %v203 = vld [vmem:[#allocation2 + $0x5b0] sm:$0xff]
    %v204 = vld [vmem:[#allocation2 + $0x5b8] sm:$0xff]
    %v205 = vld [vmem:[#allocation2 + $0x5c0] sm:$0xff]
    %v206 = vld [vmem:[#allocation2 + $0x5c8] sm:$0xff]
    %v207 = vld [vmem:[#allocation2 + $0x5d0] sm:$0xff]
    %v208 = vld [vmem:[#allocation2 + $0x5d8] sm:$0xff]
    %v209 = vld [vmem:[#allocation2 + $0x5e0] sm:$0xff]
    %v210 = vld [vmem:[#allocation2 + $0x5e8] sm:$0xff]
    %v211 = vld [vmem:[#allocation2 + $0x5f0] sm:$0xff]
    %v212 = vld [vmem:[#allocation2 + $0x5f8] sm:$0xff]
    %v213 = vld [vmem:[#allocation2 + $0x600] sm:$0xff]
    %v214 = vld [vmem:[#allocation2 + $0x608] sm:$0xff]
    %v215 = vld [vmem:[#allocation2 + $0x610] sm:$0xff]
    %v216 = vld [vmem:[#allocation2 + $0x618] sm:$0xff]
    %217 = vst [vmem:[#allocation5] sm:$0xff] %v21
    %218 = vst [vmem:[#allocation5 + $0x8] sm:$0xff] %v22
    %219 = vst [vmem:[#allocation5 + $0x10] sm:$0xff] %v23
    %220 = vst [vmem:[#allocation5 + $0x18] sm:$0xff] %v24
    %221 = vst [vmem:[#allocation5 + $0x20] sm:$0xff] %v25
    %222 = vst [vmem:[#allocation5 + $0x28] sm:$0xff] %v26
    %223 = vst [vmem:[#allocation5 + $0x30] sm:$0xff] %v27
    %224 = vst [vmem:[#allocation5 + $0x38] sm:$0xff] %v28
    %225 = vst [vmem:[#allocation5 + $0x40] sm:$0xff] %v29
    %226 = vst [vmem:[#allocation5 + $0x48] sm:$0xff] %v30
    %227 = vst [vmem:[#allocation5 + $0x50] sm:$0xff] %v31
    %228 = vst [vmem:[#allocation5 + $0x58] sm:$0xff] %v32
    %229 = vst [vmem:[#allocation5 + $0x60] sm:$0xff] %v33
    %230 = vst [vmem:[#allocation5 + $0x68] sm:$0xff] %v34
    %231 = vst [vmem:[#allocation5 + $0x70] sm:$0xff] %v35
    %232 = vst [vmem:[#allocation5 + $0x78] sm:$0xff] %v36
    %233 = vst [vmem:[#allocation5 + $0x80] sm:$0xff] %v37
    %234 = vst [vmem:[#allocation5 + $0x88] sm:$0xff] %v38
    %235 = vst [vmem:[#allocation5 + $0x90] sm:$0xff] %v39
    %236 = vst [vmem:[#allocation5 + $0x98] sm:$0xff] %v40
    %237 = vst [vmem:[#allocation5 + $0xa0] sm:$0xff] %v41
    %238 = vst [vmem:[#allocation5 + $0xa8] sm:$0xff] %v42
    %239 = vst [vmem:[#allocation5 + $0xb0] sm:$0xff] %v43
    %240 = vst [vmem:[#allocation5 + $0xb8] sm:$0xff] %v44
    %241 = vst [vmem:[#allocation5 + $0xc0] sm:$0xff] %v45
    %242 = vst [vmem:[#allocation5 + $0xc8] sm:$0xff] %v46
    %243 = vst [vmem:[#allocation5 + $0xd0] sm:$0xff] %v47
    %244 = vst [vmem:[#allocation5 + $0xd8] sm:$0xff] %v48
    %245 = vst [vmem:[#allocation5 + $0xe0] sm:$0xff] %v49
    %246 = vst [vmem:[#allocation5 + $0xe8] sm:$0xff] %v50
    %247 = vst [vmem:[#allocation5 + $0xf0] sm:$0xff] %v51
    %248 = vst [vmem:[#allocation5 + $0xf8] sm:$0xff] %v52
    %249 = vst [vmem:[#allocation5 + $0x100] sm:$0xff] %v53
    %250 = vst [vmem:[#allocation5 + $0x108] sm:$0xff] %v54
    %251 = vst [vmem:[#allocation5 + $0x110] sm:$0xff] %v55
    %252 = vst [vmem:[#allocation5 + $0x118] sm:$0xff] %v56
    %253 = vst [vmem:[#allocation5 + $0x120] sm:$0xff] %v57
    %254 = vst [vmem:[#allocation5 + $0x128] sm:$0xff] %v58
    %255 = vst [vmem:[#allocation5 + $0x130] sm:$0xff] %v59
    %256 = vst [vmem:[#allocation5 + $0x138] sm:$0xff] %v60
    %257 = vst [vmem:[#allocation5 + $0x140] sm:$0xff] %v61
    %258 = vst [vmem:[#allocation5 + $0x148] sm:$0xff] %v62
    %259 = vst [vmem:[#allocation5 + $0x150] sm:$0xff] %v63
    %260 = vst [vmem:[#allocation5 + $0x158] sm:$0xff] %v64
    %261 = vst [vmem:[#allocation5 + $0x160] sm:$0xff] %v65
    %262 = vst [vmem:[#allocation5 + $0x168] sm:$0xff] %v66
    %263 = vst [vmem:[#allocation5 + $0x170] sm:$0xff] %v67
    %264 = vst [vmem:[#allocation5 + $0x178] sm:$0xff] %v68
    %265 = vst [vmem:[#allocation5 + $0x180] sm:$0xff] %v69
    %266 = vst [vmem:[#allocation5 + $0x188] sm:$0xff] %v70
    %267 = vst [vmem:[#allocation5 + $0x190] sm:$0xff] %v71
    %268 = vst [vmem:[#allocation5 + $0x198] sm:$0xff] %v72
    %269 = vst [vmem:[#allocation5 + $0x1a0] sm:$0xff] %v73
    %270 = vst [vmem:[#allocation5 + $0x1a8] sm:$0xff] %v74
    %271 = vst [vmem:[#allocation5 + $0x1b0] sm:$0xff] %v75
    %272 = vst [vmem:[#allocation5 + $0x1b8] sm:$0xff] %v76
    %273 = vst [vmem:[#allocation5 + $0x1c0] sm:$0xff] %v77
    %274 = vst [vmem:[#allocation5 + $0x1c8] sm:$0xff] %v78
    %275 = vst [vmem:[#allocation5 + $0x1d0] sm:$0xff] %v79
    %276 = vst [vmem:[#allocation5 + $0x1d8] sm:$0xff] %v80
    %277 = vst [vmem:[#allocation5 + $0x1e0] sm:$0xff] %v81
    %278 = vst [vmem:[#allocation5 + $0x1e8] sm:$0xff] %v82
    %279 = vst [vmem:[#allocation5 + $0x1f0] sm:$0xff] %v83
    %280 = vst [vmem:[#allocation5 + $0x1f8] sm:$0xff] %v84
    %281 = vst [vmem:[#allocation5 + $0x200] sm:$0xff] %v85
    %282 = vst [vmem:[#allocation5 + $0x208] sm:$0xff] %v86
    %283 = vst [vmem:[#allocation5 + $0x210] sm:$0xff] %v87
    %284 = vst [vmem:[#allocation5 + $0x218] sm:$0xff] %v88
    %285 = vst [vmem:[#allocation5 + $0x220] sm:$0xff] %v89
    %286 = vst [vmem:[#allocation5 + $0x228] sm:$0xff] %v90
    %287 = vst [vmem:[#allocation5 + $0x230] sm:$0xff] %v91
    %288 = vst [vmem:[#allocation5 + $0x238] sm:$0xff] %v92
    %289 = vst [vmem:[#allocation5 + $0x240] sm:$0xff] %v93
    %290 = vst [vmem:[#allocation5 + $0x248] sm:$0xff] %v94
    %291 = vst [vmem:[#allocation5 + $0x250] sm:$0xff] %v95
    %292 = vst [vmem:[#allocation5 + $0x258] sm:$0xff] %v96
    %293 = vst [vmem:[#allocation5 + $0x260] sm:$0xff] %v97
    %294 = vst [vmem:[#allocation5 + $0x268] sm:$0xff] %v98
    %295 = vst [vmem:[#allocation5 + $0x270] sm:$0xff] %v99
    %296 = vst [vmem:[#allocation5 + $0x278] sm:$0xff] %v100
    %297 = vst [vmem:[#allocation5 + $0x280] sm:$0xff] %v101
    %298 = vst [vmem:[#allocation5 + $0x288] sm:$0xff] %v102
    %299 = vst [vmem:[#allocation5 + $0x290] sm:$0xff] %v103
    %300 = vst [vmem:[#allocation5 + $0x298] sm:$0xff] %v104
    %301 = vst [vmem:[#allocation5 + $0x2a0] sm:$0xff] %v105
    %302 = vst [vmem:[#allocation5 + $0x2a8] sm:$0xff] %v106
    %303 = vst [vmem:[#allocation5 + $0x2b0] sm:$0xff] %v107
    %304 = vst [vmem:[#allocation5 + $0x2b8] sm:$0xff] %v108
    %305 = vst [vmem:[#allocation5 + $0x2c0] sm:$0xff] %v109
    %306 = vst [vmem:[#allocation5 + $0x2c8] sm:$0xff] %v110
    %307 = vst [vmem:[#allocation5 + $0x2d0] sm:$0xff] %v111
    %308 = vst [vmem:[#allocation5 + $0x2d8] sm:$0xff] %v112
    %309 = vst [vmem:[#allocation5 + $0x2e0] sm:$0xff] %v113
    %310 = vst [vmem:[#allocation5 + $0x2e8] sm:$0xff] %v114
    %311 = vst [vmem:[#allocation5 + $0x2f0] sm:$0xff] %v115
    %312 = vst [vmem:[#allocation5 + $0x2f8] sm:$0xff] %v116
    %313 = vst [vmem:[#allocation5 + $0x300] sm:$0xff] %v117
    %314 = vst [vmem:[#allocation5 + $0x308] sm:$0xff] %v118
    %315 = vst [vmem:[#allocation5 + $0x310] sm:$0xff] %v119
    %316 = vst [vmem:[#allocation5 + $0x318] sm:$0xff] %v120
    %317 = vst [vmem:[#allocation5 + $0x320] sm:$0xff] %v121
    %318 = vst [vmem:[#allocation5 + $0x328] sm:$0xff] %v122
    %319 = vst [vmem:[#allocation5 + $0x330] sm:$0xff] %v123
    %320 = vst [vmem:[#allocation5 + $0x338] sm:$0xff] %v124
    %321 = vst [vmem:[#allocation5 + $0x340] sm:$0xff] %v125
    %322 = vst [vmem:[#allocation5 + $0x348] sm:$0xff] %v126
    %323 = vst [vmem:[#allocation5 + $0x350] sm:$0xff] %v127
    %324 = vst [vmem:[#allocation5 + $0x358] sm:$0xff] %v128
    %325 = vst [vmem:[#allocation5 + $0x360] sm:$0xff] %v129
    %326 = vst [vmem:[#allocation5 + $0x368] sm:$0xff] %v130
    %327 = vst [vmem:[#allocation5 + $0x370] sm:$0xff] %v131
    %328 = vst [vmem:[#allocation5 + $0x378] sm:$0xff] %v132
    %329 = vst [vmem:[#allocation5 + $0x380] sm:$0xff] %v133
    %330 = vst [vmem:[#allocation5 + $0x388] sm:$0xff] %v134
    %331 = vst [vmem:[#allocation5 + $0x390] sm:$0xff] %v135
    %332 = vst [vmem:[#allocation5 + $0x398] sm:$0xff] %v136
    %333 = vst [vmem:[#allocation5 + $0x3a0] sm:$0xff] %v137
    %334 = vst [vmem:[#allocation5 + $0x3a8] sm:$0xff] %v138
    %335 = vst [vmem:[#allocation5 + $0x3b0] sm:$0xff] %v139
    %336 = vst [vmem:[#allocation5 + $0x3b8] sm:$0xff] %v140
    %337 = vst [vmem:[#allocation5 + $0x3c0] sm:$0xff] %v141
    %338 = vst [vmem:[#allocation5 + $0x3c8] sm:$0xff] %v142
    %339 = vst [vmem:[#allocation5 + $0x3d0] sm:$0xff] %v143
    %340 = vst [vmem:[#allocation5 + $0x3d8] sm:$0xff] %v144
    %341 = vst [vmem:[#allocation5 + $0x3e0] sm:$0xff] %v145
    %342 = vst [vmem:[#allocation5 + $0x3e8] sm:$0xff] %v146
    %343 = vst [vmem:[#allocation5 + $0x3f0] sm:$0xff] %v147
    %344 = vst [vmem:[#allocation5 + $0x3f8] sm:$0xff] %v148
    %345 = vst [vmem:[#allocation5 + $0x400] sm:$0xff] %v149
    %346 = vst [vmem:[#allocation5 + $0x408] sm:$0xff] %v150
    %347 = vst [vmem:[#allocation5 + $0x410] sm:$0xff] %v151
    %348 = vst [vmem:[#allocation5 + $0x418] sm:$0xff] %v152
    %349 = vst [vmem:[#allocation5 + $0x420] sm:$0xff] %v153
    %350 = vst [vmem:[#allocation5 + $0x428] sm:$0xff] %v154
    %351 = vst [vmem:[#allocation5 + $0x430] sm:$0xff] %v155
    %352 = vst [vmem:[#allocation5 + $0x438] sm:$0xff] %v156
    %353 = vst [vmem:[#allocation5 + $0x440] sm:$0xff] %v157
    %354 = vst [vmem:[#allocation5 + $0x448] sm:$0xff] %v158
    %355 = vst [vmem:[#allocation5 + $0x450] sm:$0xff] %v159
    %356 = vst [vmem:[#allocation5 + $0x458] sm:$0xff] %v160
    %357 = vst [vmem:[#allocation5 + $0x460] sm:$0xff] %v161
    %358 = vst [vmem:[#allocation5 + $0x468] sm:$0xff] %v162
    %359 = vst [vmem:[#allocation5 + $0x470] sm:$0xff] %v163
    %360 = vst [vmem:[#allocation5 + $0x478] sm:$0xff] %v164
    %361 = vst [vmem:[#allocation5 + $0x480] sm:$0xff] %v165
    %362 = vst [vmem:[#allocation5 + $0x488] sm:$0xff] %v166
    %363 = vst [vmem:[#allocation5 + $0x490] sm:$0xff] %v167
    %364 = vst [vmem:[#allocation5 + $0x498] sm:$0xff] %v168
    %365 = vst [vmem:[#allocation5 + $0x4a0] sm:$0xff] %v169
    %366 = vst [vmem:[#allocation5 + $0x4a8] sm:$0xff] %v170
    %367 = vst [vmem:[#allocation5 + $0x4b0] sm:$0xff] %v171
    %368 = vst [vmem:[#allocation5 + $0x4b8] sm:$0xff] %v172
    %369 = vst [vmem:[#allocation5 + $0x4c0] sm:$0xff] %v173
    %370 = vst [vmem:[#allocation5 + $0x4c8] sm:$0xff] %v174
    %371 = vst [vmem:[#allocation5 + $0x4d0] sm:$0xff] %v175
    %372 = vst [vmem:[#allocation5 + $0x4d8] sm:$0xff] %v176
    %373 = vst [vmem:[#allocation5 + $0x4e0] sm:$0xff] %v177
    %374 = vst [vmem:[#allocation5 + $0x4e8] sm:$0xff] %v178
    %375 = vst [vmem:[#allocation5 + $0x4f0] sm:$0xff] %v179
    %376 = vst [vmem:[#allocation5 + $0x4f8] sm:$0xff] %v180
    %377 = vst [vmem:[#allocation5 + $0x500] sm:$0xff] %v181
    %378 = vst [vmem:[#allocation5 + $0x508] sm:$0xff] %v182
    %379 = vst [vmem:[#allocation5 + $0x510] sm:$0xff] %v183
    %380 = vst [vmem:[#allocation5 + $0x518] sm:$0xff] %v184
    %381 = vst [vmem:[#allocation5 + $0x520] sm:$0xff] %v185
    %382 = vst [vmem:[#allocation5 + $0x528] sm:$0xff] %v186
    %383 = vst [vmem:[#allocation5 + $0x530] sm:$0xff] %v187
    %384 = vst [vmem:[#allocation5 + $0x538] sm:$0xff] %v188
    %385 = vst [vmem:[#allocation5 + $0x540] sm:$0xff] %v189
    %386 = vst [vmem:[#allocation5 + $0x548] sm:$0xff] %v190
    %387 = vst [vmem:[#allocation5 + $0x550] sm:$0xff] %v191
    %388 = vst [vmem:[#allocation5 + $0x558] sm:$0xff] %v192
    %389 = vst [vmem:[#allocation5 + $0x560] sm:$0xff] %v193
    %390 = vst [vmem:[#allocation5 + $0x568] sm:$0xff] %v194
    %391 = vst [vmem:[#allocation5 + $0x570] sm:$0xff] %v195
    %392 = vst [vmem:[#allocation5 + $0x578] sm:$0xff] %v196
    %393 = vst [vmem:[#allocation5 + $0x580] sm:$0xff] %v197
    %394 = vst [vmem:[#allocation5 + $0x588] sm:$0xff] %v198
    %395 = vst [vmem:[#allocation5 + $0x590] sm:$0xff] %v199
    %396 = vst [vmem:[#allocation5 + $0x598] sm:$0xff] %v200
    %397 = vst [vmem:[#allocation5 + $0x5a0] sm:$0xff] %v201
    %398 = vst [vmem:[#allocation5 + $0x5a8] sm:$0xff] %v202
    %399 = vst [vmem:[#allocation5 + $0x5b0] sm:$0xff] %v203
    %400 = vst [vmem:[#allocation5 + $0x5b8] sm:$0xff] %v204
    %401 = vst [vmem:[#allocation5 + $0x5c0] sm:$0xff] %v205
    %402 = vst [vmem:[#allocation5 + $0x5c8] sm:$0xff] %v206
    %403 = vst [vmem:[#allocation5 + $0x5d0] sm:$0xff] %v207
    %404 = vst [vmem:[#allocation5 + $0x5d8] sm:$0xff] %v208
    %405 = vst [vmem:[#allocation5 + $0x5e0] sm:$0xff] %v209
    %406 = vst [vmem:[#allocation5 + $0x5e8] sm:$0xff] %v210
    %407 = vst [vmem:[#allocation5 + $0x5f0] sm:$0xff] %v211
    %408 = vst [vmem:[#allocation5 + $0x5f8] sm:$0xff] %v212
    %409 = vst [vmem:[#allocation5 + $0x600] sm:$0xff] %v213
    %410 = vst [vmem:[#allocation5 + $0x608] sm:$0xff] %v214
    %411 = vst [vmem:[#allocation5 + $0x610] sm:$0xff] %v215
    %412 = vst [vmem:[#allocation5 + $0x618] sm:$0xff] %v216
    // Predicated region
    $region10: #{tpu_custom_call.1} parent=1 // pred_check
      _
    $region11: #{tpu_custom_call.1} parent=1 // pred_check_branch
      %414 = sbr.rel (0) target = $region13
    $region12: #{tpu_custom_call.1} parent=1 // pred_region
      %s416 = ssub.s32 25088, 25088
      %417 = vsyncadd [#allocation4], %s416
      %s419 = sshll.u32 [#allocation5], 4
      %s420 = int_to_ptr.vmem [resolvable:$true] %s419
      %422 = dma.vmem_to_hbm [thread:$0]  %s420, 25088, %s1, [#allocation4]
    $region13: #{tpu_custom_call.1} parent=1 // pred_fallthru
      _
    // Predicated region
    $region14: #{tpu_custom_call.1} parent=1 // pred_check
      _
    $region15: #{tpu_custom_call.1} parent=1 // pred_check_branch
      %424 = sbr.rel (0) target = $region17
    $region16: #{tpu_custom_call.1} parent=1 // pred_region
      %425 = dma.done [#allocation4], 25088
    $region17: #{tpu_custom_call.1} parent=1 // pred_fallthru
      _
    %426 = vsyncpa [#allocation3], 1
    %427 = vsyncpa [#allocation4], 1

</llo_original>
